<compile_context>
chip_gen: v6e
topology: v6e:2x2x1
jax: 0.10.0
libtpu: 0.0.40
codegen_flags: <defaults>
</compile_context>

<pallas_src>
import functools

import jax
import jax.numpy as jnp
from jax.experimental import pallas as pl
from jax.experimental.pallas import tpu as pltpu


def _cross_entropy_kernel(logits_ref, target_ref, nll_ref):
    """Per-row NLL for one row tile: fused max / exp / LSE / target gather."""
    x = logits_ref[...]                               # (TILE_N, C), native dtype
    t = target_ref[...]                               # (TILE_N, 1) int32
    tn, c = x.shape

    # Target "one-hot" as a lane compare (no float one-hot materialized).
    col = jax.lax.broadcasted_iota(jnp.int32, (tn, c), 1)
    is_tgt = col == t                                 # (TILE_N, C) bool

    # Elementwise work stays in the input dtype (bf16 VPU/EUP on v6e/v7x);
    # class-axis accumulations are done in f32.
    m = jnp.max(x, axis=-1, keepdims=True)            # (TILE_N, 1)
    xs = x - m                                        # shifted logits, <= 0
    sum_exp = jnp.sum(jnp.exp(xs), axis=-1, keepdims=True,
                      dtype=jnp.float32)              # (TILE_N, 1) f32
    tgt_shift = jnp.sum(jnp.where(is_tgt, xs, jnp.zeros_like(xs)),
                        axis=-1, keepdims=True,
                        dtype=jnp.float32)            # x[target] - m, f32

    # nll = (m + log(sum_exp)) - x[target] = log(sum_exp) - (x[target] - m)
    nll_ref[...] = jnp.log(sum_exp) - tgt_shift


def _vmem_capacity_bytes():
    """Physical VMEM per TensorCore (v5e/v6e: 128 MiB, v7x: 64 MiB)."""
    try:
        cap = getattr(pltpu.get_tpu_info(), "vmem_capacity_bytes", None)
        if cap:
            return int(cap)
    except Exception:
        pass
    return 128 * 1024 * 1024


def _pick_tile_n(n, c, itemsize, vmem_cap):
    """Largest row tile whose double-buffered logits slab fits the VMEM budget."""
    # Sublane packing: f32 -> 8 rows/vreg, bf16 -> 16, int8/fp8 -> 32.
    sublane = {4: 8, 2: 16, 1: 32}.get(itemsize, 8)
    if n <= sublane:
        return n                                      # full-extent block is legal
    # Per-buffer logits budget: ~VMEM/5, capped at 20 MiB
    # (v5e/v6e -> 20 MiB, v7x -> ~12.8 MiB); 2x double-buffered stays < half VMEM.
    target_bytes = min(20 * 1024 * 1024, vmem_cap // 5)
    rows = max(sublane, target_bytes // max(1, c * itemsize))
    rows = min(rows, 2048, n)
    return max(sublane, (rows // sublane) * sublane)


@functools.partial(jax.jit, static_argnames=("reduction",))
def _cross_entropy_pallas(logits, target, weight, reduction):
    n, c = logits.shape
    target = target.astype(jnp.int32)

    vmem_cap = _vmem_capacity_bytes()
    tile_n = _pick_tile_n(n, c, logits.dtype.itemsize, vmem_cap)
    grid = (pl.cdiv(n, tile_n),)

    # Scoped-VMEM request: room for double-buffered logits tiles + small side
    # buffers; lifts v5e's 16 MiB default, capped below physical VMEM (v7x).
    tile_bytes = tile_n * c * logits.dtype.itemsize
    vmem_limit = int(min((vmem_cap * 7) // 8,
                         max(32 * 1024 * 1024, 4 * tile_bytes)))

    nll = pl.pallas_call(
        _cross_entropy_kernel,
        grid=grid,
        out_shape=jax.ShapeDtypeStruct((n, 1), jnp.float32),
        in_specs=[
            pl.BlockSpec((tile_n, c), lambda i: (i, 0)),   # logits (native dtype)
            pl.BlockSpec((tile_n, 1), lambda i: (i, 0)),   # targets
        ],
        out_specs=pl.BlockSpec((tile_n, 1), lambda i: (i, 0)),
        compiler_params=pltpu.CompilerParams(
            dimension_semantics=("parallel",),
            vmem_limit_bytes=vmem_limit,
        ),
    )(logits, target.reshape(n, 1))[:, 0]

    # Per-class weight gather is O(N) scalar glue; doing it here (not in the
    # kernel) removes a full (TILE_N, C) select + lane-reduce from the hot loop.
    # Out-of-range / negative targets (e.g. ignore_index=-100) get weight 0,
    # which coincides with ignore semantics for all three reductions.
    in_range = (target >= 0) & (target < c)
    pw = jnp.where(in_range, weight[jnp.clip(target, 0, c - 1)], 0.0)
    pw = pw.astype(jnp.float32)
    wl = nll * pw

    if reduction == "mean":
        # NaN if every row is ignored (sum(pw) == 0) — matches PyTorch.
        return jnp.sum(wl) / jnp.sum(pw)
    elif reduction == "sum":
        return jnp.sum(wl)
    else:  # 'none'
        return wl


def cross_entropy(logits, target, weight=None, reduction="mean"):
    """Matches torch.nn.functional.cross_entropy(input=(N,C), target=(N,))."""
    n, c = logits.shape
    if weight is None:
        weight = jnp.ones((c,), dtype=jnp.float32)
    return _cross_entropy_pallas(logits, target, weight, reduction)


def _reference_cross_entropy(logits, target, weight=None, reduction="mean"):
    logits = logits.astype(jnp.float32)
    n, c = logits.shape
    if weight is None:
        weight = jnp.ones((c,), dtype=jnp.float32)
    logp = jax.nn.log_softmax(logits, axis=-1)
    nll = -logp[jnp.arange(n), target]
    pw = weight[target].astype(jnp.float32)
    wl = nll * pw
    if reduction == "mean":
        return jnp.sum(wl) / jnp.sum(pw)
    elif reduction == "sum":
        return jnp.sum(wl)
    return wl


if __name__ == "__main__":
    key = jax.random.PRNGKey(0)
    k1, k2, k3 = jax.random.split(key, 3)

    # N not a multiple of the tile -> exercises the gridded path + partial tile.
    N, C = 20, 32
    logits = jax.random.normal(k1, (N, C), dtype=jnp.float32)
    target = jax.random.randint(k2, (N,), 0, C, dtype=jnp.int32)
    class_w = jax.random.uniform(k3, (C,), dtype=jnp.float32) + 0.5

    # default path: weight=None, reduction='mean'
    out_mean = cross_entropy(logits, target)
    jax.block_until_ready(out_mean)

    # weighted + other reductions
    out_wmean = cross_entropy(logits, target, weight=class_w, reduction="mean")
    out_sum = cross_entropy(logits, target, weight=class_w, reduction="sum")
    out_none = cross_entropy(logits, target, weight=class_w, reduction="none")
    jax.block_until_ready((out_wmean, out_sum, out_none))

    ref_mean = _reference_cross_entropy(logits, target)
    ref_wmean = _reference_cross_entropy(logits, target, class_w, "mean")
    ref_sum = _reference_cross_entropy(logits, target, class_w, "sum")
    ref_none = _reference_cross_entropy(logits, target, class_w, "none")

    assert jnp.allclose(out_mean, ref_mean, atol=1e-5, rtol=1e-5)
    assert jnp.allclose(out_wmean, ref_wmean, atol=1e-5, rtol=1e-5)
    assert jnp.allclose(out_sum, ref_sum, atol=1e-4, rtol=1e-5)
    assert jnp.allclose(out_none, ref_none, atol=1e-5, rtol=1e-5)

    # bf16 logits: stay bf16 on the HBM wire AND through the elementwise/exp
    # work; only the class-axis accumulations are f32 (hence looser tolerance).
    logits_bf16 = logits.astype(jnp.bfloat16)
    out_bf16 = cross_entropy(logits_bf16, target, weight=class_w, reduction="mean")
    ref_bf16 = _reference_cross_entropy(logits_bf16, target, class_w, "mean")
    jax.block_until_ready(out_bf16)
    assert jnp.allclose(out_bf16, ref_bf16, atol=3e-2, rtol=1e-2)

    print("KERNEL_OK")
</pallas_src>

<mosaic_0001>
module attributes {stable_mosaic.version = 11 : i64} {
  func.func @_cross_entropy_kernel(%arg0: i32, %arg1: memref<16x32xf32, #tpu.memory_space<vmem>>, %arg2: memref<16x1xi32, #tpu.memory_space<vmem>>, %arg3: memref<16x1xf32, #tpu.memory_space<vmem>>) attributes {dimension_semantics = [#tpu.dimension_semantics<parallel>], iteration_bounds = array<i64: 2>, scalar_prefetch = 0 : i64, scratch_operands = 0 : i64, tpu.core_type = #tpu.core_type<tc>, window_params = [{transform_indices = @transform_0, window_bounds = array<i64: 16, 32>}, {transform_indices = @transform_1, window_bounds = array<i64: 16, 1>}, {transform_indices = @transform_2, window_bounds = array<i64: 16, 1>}]} {
    %c0 = arith.constant 0 : index
    %c0_0 = arith.constant 0 : index
    %0 = vector.load %arg1[%c0, %c0_0] : memref<16x32xf32, #tpu.memory_space<vmem>>, vector<16x32xf32>
    %c0_1 = arith.constant 0 : index
    %c0_2 = arith.constant 0 : index
    %1 = vector.load %arg2[%c0_1, %c0_2] : memref<16x1xi32, #tpu.memory_space<vmem>>, vector<16x1xi32>
    %2 = tpu.iota {dimensions = array<i32: 1>} : vector<16x32xi32>
    %3 = vector.broadcast %1 : vector<16x1xi32> to vector<16x32xi32>
    %4 = arith.cmpi eq, %2, %3 : vector<16x32xi32>
    %cst = arith.constant dense<0xFF800000> : vector<16xf32>
    %5 = vector.multi_reduction <maximumf>, %0, %cst [1] : vector<16x32xf32> to vector<16xf32>
    %6 = vector.shape_cast %5 : vector<16xf32> to vector<16x1xf32>
    %7 = vector.broadcast %6 : vector<16x1xf32> to vector<16x32xf32>
    %8 = arith.subf %0, %7 : vector<16x32xf32>
    %9 = math.exp %8 : vector<16x32xf32>
    %cst_3 = arith.constant dense<0.000000e+00> : vector<16xf32>
    %10 = vector.multi_reduction <add>, %9, %cst_3 [1] : vector<16x32xf32> to vector<16xf32>
    %11 = vector.shape_cast %10 : vector<16xf32> to vector<16x1xf32>
    %cst_4 = arith.constant 0.000000e+00 : f32
    %12 = vector.broadcast %cst_4 : f32 to vector<16x32xf32>
    %13 = arith.select %4, %8, %12 : vector<16x32xi1>, vector<16x32xf32>
    %cst_5 = arith.constant dense<0.000000e+00> : vector<16xf32>
    %14 = vector.multi_reduction <add>, %13, %cst_5 [1] : vector<16x32xf32> to vector<16xf32>
    %15 = vector.shape_cast %14 : vector<16xf32> to vector<16x1xf32>
    %16 = math.log %11 : vector<16x1xf32>
    %17 = arith.subf %16, %15 : vector<16x1xf32>
    %c0_6 = arith.constant 0 : index
    %c0_7 = arith.constant 0 : index
    %18 = vector.load %arg3[%c0_6, %c0_7] : memref<16x1xf32, #tpu.memory_space<vmem>>, vector<16x1xf32>
    tpu.vector_store %arg3[%c0_6, %c0_7], %17 {strides = array<i32>} : memref<16x1xf32, #tpu.memory_space<vmem>>, vector<16x1xf32>,
    return
  }
  func.func @transform_0(%arg0: i32) -> (i32, i32) {
    %c0_i32 = arith.constant 0 : i32
    %c0_i32_0 = arith.constant 0 : i32
    return %arg0, %c0_i32 : i32, i32
  }
  func.func @transform_1(%arg0: i32) -> (i32, i32) {
    %c0_i32 = arith.constant 0 : i32
    %c0_i32_0 = arith.constant 0 : i32
    return %arg0, %c0_i32 : i32, i32
  }
  func.func @transform_2(%arg0: i32) -> (i32, i32) {
    %c0_i32 = arith.constant 0 : i32
    %c0_i32_0 = arith.constant 0 : i32
    return %arg0, %c0_i32 : i32, i32
  }
}

</mosaic_0001>

<llo_original>
// kernel: _cross_entropy_pallas.1
$region0: #{_cross_entropy_pallas.1}
  #allocation0 [shape = 'u32[]', space=smem, size = 0x4, offset = 0x4, fixed_abs, tag = 'smem constant byte address 0x4 - core index']
  #allocation1 [shape = 'u32[144,128]{1,0:T(1,128)}', space=vmem, size = 0x12000, scoped, tag = 'internal scratch']
  %s0 = inlined_call_operand.vmem [shape: f32[20,32], index: 0, kind: input, shape index: {}]
  %s1 = inlined_call_operand.vmem [shape: s32[20,1], index: 1, kind: input, shape index: {}]
  %s2 = inlined_call_operand.vmem [shape: f32[20,1], index: 2, kind: output, shape index: {}]
  %s3 = sld [smem:[#allocation0]]
  $region89: #{_cross_entropy_pallas.1} parent=0
    _
  %s5 = ssub.s32 1, %s3
  %s6 = scalar_select 0, %s5, %s3
  $region1: #{_cross_entropy_pallas.1} parent=0
    #allocation2 [shape = 'u8[16384]{0}', space=vmem, size = 0x4000, scoped, tag = 'output window, operand 0']
    loop: start=0, step=1, limit=4
    $region2: #{_cross_entropy_pallas.1} parent=1 // loop_pre_header
      _
    $region3: #{_cross_entropy_pallas.1} parent=1 // loop_header
      %s8 = sphi 0, %s12
      %p9 = scmp.ge.s32.totalorder %s8, 4
      %s18 = sphi 0, %s20
      %s21 = sphi 0, %s18
      %s22 = sphi 0, %s21
      %s38 = sphi 0, %s22
      %s44 = sphi 0, %s46
      %s47 = sphi 0, %s44
      %s48 = sphi 0, %s47
      %s64 = sphi 0, %s48
      %s70 = sphi 0, %s72
      %s73 = sphi 0, %s70
      %s74 = sphi 0, %s73
      %s90 = sphi 0, %s74
    $region4: #{_cross_entropy_pallas.1} parent=1 // loop_header_branch
      %11 = sbr.rel (%p9) target = $region8
    $region5: #{_cross_entropy_pallas.1} parent=1 // loop_body
      %s13 = ssub.s32 %s8, 1
      %s14 = ssub.s32 %s8, 2
      %s15 = sadd.s32 %s8, 1
      %s16 = ssub.s32 %s8, %s15
      %p17 = scmp.eq.s32.totalorder %s16, 0
      %s19 = sadd.s32 %s18, 1
      %s20 = scalar_select %p17, %s18, %s19
      %p23 = pneg %p17
      %p24 = scmp.eq.s32.totalorder %s8, 1
      %p25 = por %p23, %p24
      %p26 = scmp.ne.s32.totalorder %s18, %s21
      %p27 = scmp.eq.s32.totalorder %s8, 0
      %p28 = por %p26, %p27
      %p29 = scmp.ne.s32.totalorder %s18, %s21
      %p30 = scmp.eq.s32.totalorder %s13, 1
      %p31 = por %p29, %p30
      %p32 = scmp.ne.s32.totalorder %s21, %s22
      %p33 = scmp.eq.s32.totalorder %s13, 0
      %p34 = por %p32, %p33
      %p35 = scmp.ne.s32.totalorder %s21, %s22
      %p36 = scmp.eq.s32.totalorder %s14, 1
      %p37 = por %p35, %p36
      %p39 = scmp.ne.s32.totalorder %s22, %s38
      %p40 = scmp.eq.s32.totalorder %s14, 0
      %p41 = por %p39, %p40
      %s42 = ssub.s32 %s8, %s15
      %p43 = scmp.eq.s32.totalorder %s42, 0
      %s45 = sadd.s32 %s44, 1
      %s46 = scalar_select %p43, %s44, %s45
      %p49 = pneg %p43
      %p50 = scmp.eq.s32.totalorder %s8, 1
      %p51 = por %p49, %p50
      %p52 = scmp.ne.s32.totalorder %s44, %s47
      %p53 = scmp.eq.s32.totalorder %s8, 0
      %p54 = por %p52, %p53
      %p55 = scmp.ne.s32.totalorder %s44, %s47
      %p56 = scmp.eq.s32.totalorder %s13, 1
      %p57 = por %p55, %p56
      %p58 = scmp.ne.s32.totalorder %s47, %s48
      %p59 = scmp.eq.s32.totalorder %s13, 0
      %p60 = por %p58, %p59
      %p61 = scmp.ne.s32.totalorder %s47, %s48
      %p62 = scmp.eq.s32.totalorder %s14, 1
      %p63 = por %p61, %p62
      %p65 = scmp.ne.s32.totalorder %s48, %s64
      %p66 = scmp.eq.s32.totalorder %s14, 0
      %p67 = por %p65, %p66
      %s68 = ssub.s32 %s8, %s15
      %p69 = scmp.eq.s32.totalorder %s68, 0
      %s71 = sadd.s32 %s70, 1
      %s72 = scalar_select %p69, %s70, %s71
      %p75 = pneg %p69
      %p76 = scmp.eq.s32.totalorder %s8, 1
      %p77 = por %p75, %p76
      %p78 = scmp.ne.s32.totalorder %s70, %s73
      %p79 = scmp.eq.s32.totalorder %s8, 0
      %p80 = por %p78, %p79
      %p81 = scmp.ne.s32.totalorder %s70, %s73
      %p82 = scmp.eq.s32.totalorder %s13, 1
      %p83 = por %p81, %p82
      %p84 = scmp.ne.s32.totalorder %s73, %s74
      %p85 = scmp.eq.s32.totalorder %s13, 0
      %p86 = por %p84, %p85
      %p87 = scmp.ne.s32.totalorder %s73, %s74
      %p88 = scmp.eq.s32.totalorder %s14, 1
      %p89 = por %p87, %p88
      %p91 = scmp.ne.s32.totalorder %s74, %s90
      %p92 = scmp.eq.s32.totalorder %s14, 0
      %p93 = por %p91, %p92
      %p94 = scmp.le.s32.totalorder 1, %s8
      %p95 = scmp.lt.s32.totalorder %s8, 3
      %p96 = pnand %p94, %p95
      %p97 = pneg %p96
      // Predicated region
      $region9: #{_cross_entropy_pallas.1} parent=5 // pred_check
        _
      $region10: #{_cross_entropy_pallas.1} parent=5 // pred_check_branch
        %99 = sbr.rel (%p96) target = $region12
      $region11: #{_cross_entropy_pallas.1} parent=5 // pred_region
        %s100 = ssub.s32 %s8, 1
      $region12: #{_cross_entropy_pallas.1} parent=5 // pred_fallthru
        _
      %p101 = scmp.lt.s32.totalorder %s8, 2
      // Predicated region
      $region13: #{_cross_entropy_pallas.1} parent=5 // pred_check
        %p102 = pneg %p101
      $region14: #{_cross_entropy_pallas.1} parent=5 // pred_check_branch
        %104 = sbr.rel (%p102) target = $region16
      $region15: #{_cross_entropy_pallas.1} parent=5 // pred_region
        // Predicated region
        $region17: #{_cross_entropy_pallas.1} parent=15 // pred_check
          %p105 = pneg %p28
        $region18: #{_cross_entropy_pallas.1} parent=15 // pred_check_branch
          %107 = sbr.rel (%p105) target = $region20
        $region19: #{_cross_entropy_pallas.1} parent=15 // pred_region
          %s108 = smul.u32 2, %s8
          %s109 = ssub.s32 3, %s108
          %p110 = scmp.lt.s32.totalorder %s109, 2
          %s111 = scalar_select %p110, %s109, 2
          %s112 = smul.u32 128, %s111
          %p113 = scmp.lt.s32.totalorder %s108, 2
          %s114 = scalar_select %p113, %s108, 2
          %s115 = smul.addr %s114, 8
          %s116 = scalar_lea.vmem %s0, %s115
          %s117 = smul.u32 2, %s8
          %s118 = ssub.s32 3, %s117
          %p119 = scmp.lt.s32.totalorder %s118, 2
          %s120 = scalar_select %p119, %s118, 2
          %s121 = smul.u32 128, %s120
        $region20: #{_cross_entropy_pallas.1} parent=15 // pred_fallthru
          _
        // Predicated region
        $region21: #{_cross_entropy_pallas.1} parent=15 // pred_check
          %p122 = pneg %p54
        $region22: #{_cross_entropy_pallas.1} parent=15 // pred_check_branch
          %124 = sbr.rel (%p122) target = $region24
        $region23: #{_cross_entropy_pallas.1} parent=15 // pred_region
          %s125 = smul.u32 2, %s8
          %s126 = ssub.s32 3, %s125
          %p127 = scmp.lt.s32.totalorder %s126, 2
          %s128 = scalar_select %p127, %s126, 2
          %s129 = smul.u32 128, %s128
          %p130 = scmp.lt.s32.totalorder %s125, 2
          %s131 = scalar_select %p130, %s125, 2
          %s132 = smul.addr %s131, 8
          %s133 = scalar_lea.vmem %s1, %s132
          %s134 = smul.u32 2, %s8
          %s135 = ssub.s32 3, %s134
          %p136 = scmp.lt.s32.totalorder %s135, 2
          %s137 = scalar_select %p136, %s135, 2
          %s138 = smul.u32 128, %s137
        $region24: #{_cross_entropy_pallas.1} parent=15 // pred_fallthru
          _
      $region16: #{_cross_entropy_pallas.1} parent=5 // pred_fallthru
        _
      %p139 = scmp.le.s32.totalorder 1, %s8
      %p140 = scmp.lt.s32.totalorder %s8, 3
      %p141 = pnand %p139, %p140
      %p142 = pneg %p141
      // Predicated region
      $region25: #{_cross_entropy_pallas.1} parent=5 // pred_check
        _
      $region26: #{_cross_entropy_pallas.1} parent=5 // pred_check_branch
        %144 = sbr.rel (%p141) target = $region28
      $region27: #{_cross_entropy_pallas.1} parent=5 // pred_region
        %s145 = ssub.s32 %s8, 1
        %s146 = smul.u32 2, %s13
        %s147 = ssub.s32 3, %s146
        %p148 = scmp.lt.s32.totalorder %s147, 2
        %s149 = scalar_select %p148, %s147, 2
        %s150 = smul.u32 128, %s149
        %p151 = scmp.lt.s32.totalorder %s146, 2
        %s152 = scalar_select %p151, %s146, 2
        %s153 = smul.addr %s152, 8
        %s154 = scalar_lea.vmem %s0, %s153
        %p155 = pneg %p34
        %p156 = pneg %p31
        %s157 = smul.u32 2, %s13
        %s158 = ssub.s32 3, %s157
        %p159 = scmp.lt.s32.totalorder %s158, 2
        %s160 = scalar_select %p159, %s158, 2
        %s161 = smul.u32 128, %s160
        %p162 = scmp.lt.s32.totalorder %s157, 2
        %s163 = scalar_select %p162, %s157, 2
        %s164 = smul.addr %s163, 8
        %s165 = scalar_lea.vmem %s1, %s164
        %p166 = pneg %p60
        %p167 = pneg %p57
        %p168 = pneg %p86
        %p169 = pneg %p83
        %s170 = sand.u32 %s73, 1
        %s171 = sand.u32 %s73, 1
        %s172 = smul.addr %s171, 16
        %s173 = scalar_lea.vmem [#allocation2], %s172
        %s174 = smul.u32 2, %s13
        %s175 = ssub.s32 3, %s174
        %p176 = scmp.lt.s32.totalorder %s175, 2
        %s177 = scalar_select %p176, %s175, 2
        %s178 = smul.u32 128, %s177
        %p179 = scmp.lt.s32.totalorder %s174, 2
        %s180 = scalar_select %p179, %s174, 2
        %s181 = smul.addr %s180, 8
        %s182 = scalar_lea.vmem %s0, %s181
        %s183 = smul.u32 2, %s13
        %s184 = ssub.s32 3, %s183
        %p185 = scmp.lt.s32.totalorder %s184, 2
        %s186 = scalar_select %p185, %s184, 2
        %s187 = smul.u32 128, %s186
        %s188 = smul.u32 2, %s13
        %s189 = ssub.s32 3, %s188
        %p190 = scmp.lt.s32.totalorder %s189, 2
        %s191 = scalar_select %p190, %s189, 2
        %s192 = smul.u32 128, %s191
        %p193 = scmp.lt.s32.totalorder %s188, 2
        %s194 = scalar_select %p193, %s188, 2
        %s195 = smul.addr %s194, 8
        %s196 = scalar_lea.vmem %s1, %s195
        %s197 = smul.u32 2, %s13
        %s198 = ssub.s32 3, %s197
        %p199 = scmp.lt.s32.totalorder %s198, 2
        %s200 = scalar_select %p199, %s198, 2
        %s201 = smul.u32 128, %s200
        %s202 = smul.u32 2, %s13
        %s203 = ssub.s32 3, %s202
        %p204 = scmp.lt.s32.totalorder %s203, 2
        %s205 = scalar_select %p204, %s203, 2
        %s206 = smul.u32 128, %s205
        %v207 = vld [vmem:[%s182] sm:$0xff]
        %v208 = vld [vmem:[%s182 + $0x8] sm:$0xff]
        %v209 = vld [vmem:[%s196] sm:$0xff]
        %v210 = vld [vmem:[%s196 + $0x8] sm:$0xff]
        %v211 = vlaneseq
        %v212 = vand.u32 %v211, 127
        %213 = vset.pattern.permute.xlu0 0
        %214 = vperm.xlu0 %213, %v209
        %v215 = vpop.permute.xlu0 %214
        %216 = vset.pattern.permute.xlu0 0
        %217 = vperm.xlu0 %216, %v210
        %v218 = vpop.permute.xlu0 %217
        %vm219 = vcmp.eq.s32.totalorder %v212, %v215
        %vm220 = vcmp.eq.s32.totalorder %v212, %v218
        %vm221 = vcmask 261120
        %v222 = vsel %vm221, %v207, -inf
        %223 = vmax.xlane.f32.xlu0 %v222
        %v224 = vpop.xlane.xlu0 %223
        %v225 = vsel %vm221, %v208, -inf
        %226 = vmax.xlane.f32.xlu0 %v225
        %v227 = vpop.xlane.xlu0 %226
        %v228 = vsub.f32 %v207, %v224
        %v229 = vsub.f32 %v208, %v227
        %v230 = vmul.f32 %v228, 1.442695
        %v231 = vpow.pop %v230
        %v232 = vmul.f32 %v229, 1.442695
        %v233 = vpow.pop %v232
        %v234 = vsel %vm221, %v231, 0.0
        %235 = vadd.xlane.f32.xlu0 %v234
        %v236 = vpop.xlane.xlu0 %235
        %v237 = vsel %vm221, %v233, 0.0
        %238 = vadd.xlane.f32.xlu0 %v237
        %v239 = vpop.xlane.xlu0 %238
        %v240 = vsel %vm219, %v228, 0.0
        %v241 = vsel %vm220, %v229, 0.0
        %v242 = vsel %vm221, %v240, 0.0
        %243 = vadd.xlane.f32.xlu0 %v242
        %v244 = vpop.xlane.xlu0 %243
        %v245 = vsel %vm221, %v241, 0.0
        %246 = vadd.xlane.f32.xlu0 %v245
        %v247 = vpop.xlane.xlu0 %246
        %v248 = vlog2.pop %v236
        %v249 = vmul.f32 %v248, 0.6931472
        %v250 = vlog2.pop %v239
        %v251 = vmul.f32 %v250, 0.6931472
        %v252 = vsub.f32 %v249, %v244
        %v253 = vsub.f32 %v251, %v247
        %vm254 = vcmask 7168
        %255 = vst.msk [vmem:[%s173] sm:$0xff] %vm254, %v252
        %256 = vst.msk [vmem:[%s173 + $0x8] sm:$0xff] %vm254, %v253
        %s257 = sand.u32 %s73, 1
        %s258 = sand.u32 %s73, 1
        %s259 = smul.addr %s258, 16
        %s260 = scalar_lea.vmem [#allocation2], %s259
        // Predicated region
        $region29: #{_cross_entropy_pallas.1} parent=27 // pred_check
          %p261 = pneg %p83
        $region30: #{_cross_entropy_pallas.1} parent=27 // pred_check_branch
          %263 = sbr.rel (%p261) target = $region32
        $region31: #{_cross_entropy_pallas.1} parent=27 // pred_region
          %s264 = smul.u32 2, %s13
          %s265 = ssub.s32 3, %s264
          %p266 = scmp.lt.s32.totalorder %s265, 2
          %s267 = scalar_select %p266, %s265, 2
          %s268 = smul.u32 128, %s267
          %p269 = scmp.ne.s32.totalorder 0, %s268
          %s270 = smul.addr %s264, 8
          %s271 = scalar_lea.vmem %s2, %s270
          // Predicated region
          $region33: #{_cross_entropy_pallas.1} parent=31 // pred_check
            %p272 = pneg %p269
          $region34: #{_cross_entropy_pallas.1} parent=31 // pred_check_branch
            %274 = sbr.rel (%p272) target = $region36
          $region35: #{_cross_entropy_pallas.1} parent=31 // pred_region
            // Predicated region
            $region37: #{_cross_entropy_pallas.1} parent=35 // pred_check
              _
            $region38: #{_cross_entropy_pallas.1} parent=35 // pred_check_branch
              %276 = sbr.rel (0) target = $region40
            $region39: #{_cross_entropy_pallas.1} parent=35 // pred_region
              // Predicated region
              $region59: #{_cross_entropy_pallas.1} parent=39 // pred_check
                _
              $region60: #{_cross_entropy_pallas.1} parent=39 // pred_check_branch
                %328 = sbr.rel (0) target = $region62
              $region61: #{_cross_entropy_pallas.1} parent=39 // pred_region
                %s329 = sshrl.u32 %s267, 1
                // While loop
                $region63: #{_cross_entropy_pallas.1} parent=61 // loop_pre_header
                  _
                $region64: #{_cross_entropy_pallas.1} parent=61 // loop_header
                  %s331 = sphi 0, %s333
                  %p332 = scmp.ge.s32.totalorder %s331, %s329
                  %s336 = sphi 0, %s345
                  %s337 = sphi %s260, %s348
                  %s338 = sphi %s271, %s349
                $region65: #{_cross_entropy_pallas.1} parent=61 // loop_header_branch
                  %335 = sbr.rel (%p332) target = $region69
                $region66: #{_cross_entropy_pallas.1} parent=61 // loop_body
                  %v339 = vld [vmem:[%s337] sm:$0xff]
                  %340 = vst [vmem:[%s338] sm:$0xff] %v339
                  %v341 = vld [vmem:[%s337 + $0x8] sm:$0xff]
                  %342 = vst [vmem:[%s338 + $0x8] sm:$0xff] %v341
                  %s343 = sadd.s32 1, %s336
                  %p344 = scmp.ge.s32.totalorder %s343, %s329
                  %s345 = scalar_select %p344, 0, %s343
                  %s346 = smul.u32 %s345, 16
                  %s347 = smul.u32 %s345, 16
                  %s348 = scalar_lea.vmem %s260, %s346 [#allocation2]
                  %s349 = scalar_lea.vmem %s271, %s347
                $region67: #{_cross_entropy_pallas.1} parent=61 // loop_footer
                  %s333 = sadd.s32 %s331, 1
                $region68: #{_cross_entropy_pallas.1} parent=61 // loop_footer_branch
                  %330 = sbr.rel target = $region64
                $region69: #{_cross_entropy_pallas.1} parent=61 // loop_exit
                  _
                %s350 = sshrl.u32 %s267, 1
                %s351 = sand.u32 %s267, 1
                %s352 = smul.u32 %s350, 2
                %s353 = smul.u32 8, %s352
                %s354 = scalar_lea.vmem %s260, %s353 [#allocation2]
                %s355 = smul.u32 8, %s352
                %s356 = scalar_lea.vmem %s271, %s355
                // While loop
                $region70: #{_cross_entropy_pallas.1} parent=61 // loop_pre_header
                  _
                $region71: #{_cross_entropy_pallas.1} parent=61 // loop_header
                  %s358 = sphi 0, %s360
                  %p359 = scmp.ge.s32.totalorder %s358, %s351
                  %s363 = sphi 0, %s370
                  %s364 = sphi %s354, %s373
                  %s365 = sphi %s356, %s374
                $region72: #{_cross_entropy_pallas.1} parent=61 // loop_header_branch
                  %362 = sbr.rel (%p359) target = $region76
                $region73: #{_cross_entropy_pallas.1} parent=61 // loop_body
                  %v366 = vld [vmem:[%s364] sm:$0xff]
                  %367 = vst [vmem:[%s365] sm:$0xff] %v366
                  %s368 = sadd.s32 1, %s363
                  %p369 = scmp.ge.s32.totalorder %s368, %s351
                  %s370 = scalar_select %p369, 0, %s368
                  %s371 = smul.u32 %s370, 8
                  %s372 = smul.u32 %s370, 8
                  %s373 = scalar_lea.vmem %s354, %s371 [#allocation2]
                  %s374 = scalar_lea.vmem %s356, %s372
                $region74: #{_cross_entropy_pallas.1} parent=61 // loop_footer
                  %s360 = sadd.s32 %s358, 1
                $region75: #{_cross_entropy_pallas.1} parent=61 // loop_footer_branch
                  %357 = sbr.rel target = $region71
                $region76: #{_cross_entropy_pallas.1} parent=61 // loop_exit
                  _
              $region62: #{_cross_entropy_pallas.1} parent=39 // pred_fallthru
                _
              // Predicated region
              $region77: #{_cross_entropy_pallas.1} parent=39 // pred_check
                _
              $region78: #{_cross_entropy_pallas.1} parent=39 // pred_check_branch
                %376 = sbr.rel target = $region80
              $region79: #{_cross_entropy_pallas.1} parent=39 // pred_region
                _
              $region80: #{_cross_entropy_pallas.1} parent=39 // pred_fallthru
                _
            $region40: #{_cross_entropy_pallas.1} parent=35 // pred_fallthru
              _
            // Predicated region
            $region41: #{_cross_entropy_pallas.1} parent=35 // pred_check
              _
            $region42: #{_cross_entropy_pallas.1} parent=35 // pred_check_branch
              %278 = sbr.rel target = $region44
            $region43: #{_cross_entropy_pallas.1} parent=35 // pred_region
              %s280 = ssub.s32 256, 1
              %s281 = sshrl.u32 %s267, 1
              // While loop
              $region45: #{_cross_entropy_pallas.1} parent=43 // loop_pre_header
                _
              $region46: #{_cross_entropy_pallas.1} parent=43 // loop_header
                %s283 = sphi 0, %s285
                %p284 = scmp.ge.s32.totalorder %s283, %s281
                %s288 = sphi 0, %s297
                %s289 = sphi %s260, %s300
                %s290 = sphi %s271, %s301
              $region47: #{_cross_entropy_pallas.1} parent=43 // loop_header_branch
                %287 = sbr.rel (%p284) target = $region51
              $region48: #{_cross_entropy_pallas.1} parent=43 // loop_body
                %v291 = vld [vmem:[%s289] sm:%s280]
                %292 = vst [vmem:[%s290] sm:%s280] %v291
                %v293 = vld [vmem:[%s289 + $0x8] sm:%s280]
                %294 = vst [vmem:[%s290 + $0x8] sm:%s280] %v293
                %s295 = sadd.s32 1, %s288
                %p296 = scmp.ge.s32.totalorder %s295, %s281
                %s297 = scalar_select %p296, 0, %s295
                %s298 = smul.u32 %s297, 16
                %s299 = smul.u32 %s297, 16
                %s300 = scalar_lea.vmem %s260, %s298 [#allocation2]
                %s301 = scalar_lea.vmem %s271, %s299
              $region49: #{_cross_entropy_pallas.1} parent=43 // loop_footer
                %s285 = sadd.s32 %s283, 1
              $region50: #{_cross_entropy_pallas.1} parent=43 // loop_footer_branch
                %282 = sbr.rel target = $region46
              $region51: #{_cross_entropy_pallas.1} parent=43 // loop_exit
                _
              %s302 = sshrl.u32 %s267, 1
              %s303 = sand.u32 %s267, 1
              %s304 = smul.u32 %s302, 2
              %s305 = smul.u32 8, %s304
              %s306 = scalar_lea.vmem %s260, %s305 [#allocation2]
              %s307 = smul.u32 8, %s304
              %s308 = scalar_lea.vmem %s271, %s307
              // While loop
              $region52: #{_cross_entropy_pallas.1} parent=43 // loop_pre_header
                _
              $region53: #{_cross_entropy_pallas.1} parent=43 // loop_header
                %s310 = sphi 0, %s312
                %p311 = scmp.ge.s32.totalorder %s310, %s303
                %s315 = sphi 0, %s322
                %s316 = sphi %s306, %s325
                %s317 = sphi %s308, %s326
              $region54: #{_cross_entropy_pallas.1} parent=43 // loop_header_branch
                %314 = sbr.rel (%p311) target = $region58
              $region55: #{_cross_entropy_pallas.1} parent=43 // loop_body
                %v318 = vld [vmem:[%s316] sm:%s280]
                %319 = vst [vmem:[%s317] sm:%s280] %v318
                %s320 = sadd.s32 1, %s315
                %p321 = scmp.ge.s32.totalorder %s320, %s303
                %s322 = scalar_select %p321, 0, %s320
                %s323 = smul.u32 %s322, 8
                %s324 = smul.u32 %s322, 8
                %s325 = scalar_lea.vmem %s306, %s323 [#allocation2]
                %s326 = scalar_lea.vmem %s308, %s324
              $region56: #{_cross_entropy_pallas.1} parent=43 // loop_footer
                %s312 = sadd.s32 %s310, 1
              $region57: #{_cross_entropy_pallas.1} parent=43 // loop_footer_branch
                %309 = sbr.rel target = $region53
              $region58: #{_cross_entropy_pallas.1} parent=43 // loop_exit
                _
            $region44: #{_cross_entropy_pallas.1} parent=35 // pred_fallthru
              _
          $region36: #{_cross_entropy_pallas.1} parent=31 // pred_fallthru
            _
          %377 = vnop
        $region32: #{_cross_entropy_pallas.1} parent=27 // pred_fallthru
          _
      $region28: #{_cross_entropy_pallas.1} parent=5 // pred_fallthru
        _
      %p378 = scmp.le.s32.totalorder 2, %s8
      // Predicated region
      $region81: #{_cross_entropy_pallas.1} parent=5 // pred_check
        %p379 = pneg %p378
      $region82: #{_cross_entropy_pallas.1} parent=5 // pred_check_branch
        %381 = sbr.rel (%p379) target = $region84
      $region83: #{_cross_entropy_pallas.1} parent=5 // pred_region
        %s382 = ssub.s32 %s8, 2
        // Predicated region
        $region85: #{_cross_entropy_pallas.1} parent=83 // pred_check
          %p383 = pneg %p89
        $region86: #{_cross_entropy_pallas.1} parent=83 // pred_check_branch
          %385 = sbr.rel (%p383) target = $region88
        $region87: #{_cross_entropy_pallas.1} parent=83 // pred_region
          %s386 = sand.u32 %s74, 1
          %s387 = sand.u32 %s74, 1
          %s388 = smul.addr %s387, 16
          %s389 = scalar_lea.vmem [#allocation2], %s388
        $region88: #{_cross_entropy_pallas.1} parent=83 // pred_fallthru
          _
      $region84: #{_cross_entropy_pallas.1} parent=5 // pred_fallthru
        _
    $region6: #{_cross_entropy_pallas.1} parent=1 // loop_footer
      %s12 = sadd.s32 1, %s8
    $region7: #{_cross_entropy_pallas.1} parent=1 // loop_footer_branch
      %7 = sbr.rel target = $region3
    $region8: #{_cross_entropy_pallas.1} parent=1 // loop_exit
      _

</llo_original>
